<compile_context>
chip_gen: v7x
topology: tpu7x:2x2x1
jax: 0.10.0
libtpu: 0.0.40
codegen_flags: <defaults>
</compile_context>

<pallas_src>
import functools

import jax
import jax.numpy as jnp
from jax import lax
from jax.experimental import pallas as pl
from jax.experimental.pallas import tpu as pltpu


def _cdiv(a, b):
    return -(-a // b)


def _hw_config():
    """(block_b, vmem_limit_bytes, force_two_steps) per TPU generation."""
    try:
        vmem = int(pltpu.get_tpu_info().vmem_capacity_bytes)
    except Exception:
        # Conservative fallback that runs everywhere.
        return 128, 32 * 1024 * 1024, False
    if vmem >= 100 * 1024 * 1024:
        # v5e / v6e: 128 MiB VMEM, HBM-bound -> bigger blocks, deeper limit.
        return 256, 64 * 1024 * 1024, False
    # v7x: 64 MiB VMEM per TensorCore -> keep TB=128, cap scoped VMEM,
    # and force >=2 grid steps so the parallel axis shards across both TCs.
    return 128, 48 * 1024 * 1024, True


def _gram_loss_kernel(m64_ref, out_ref, *, matmul_dtype):
    # (TB, 64, 64) block; cast once to the MXU dtype (no f32 copy kept).
    ym = m64_ref[...].astype(matmul_dtype)
    # Batched Gram: g[b] = M[b] @ M[b]^T, f32 accumulation on the MXU.
    g = lax.dot_general(
        ym, ym, (((2,), (2,)), ((0,), (0,))),
        preferred_element_type=jnp.float32)
    # Fused ||M M^T - I||_F^2: subtract 1 on the diagonal (broadcast over TB).
    ident = (lax.broadcasted_iota(jnp.int32, (1, 64, 64), 1)
             == lax.broadcasted_iota(jnp.int32, (1, 64, 64), 2)
             ).astype(jnp.float32)
    d = g - ident
    # Lane-dense broadcast store of this block's partial sum.
    out_ref[...] = jnp.broadcast_to(jnp.sum(d * d), out_ref.shape)


def pointnet_tr_loss(matrix3x3, matrix64x64, *, block_b=None,
                     matmul_dtype=jnp.bfloat16, vmem_limit_bytes=None):
    # torch .flatten(end_dim=-3)
    m3 = matrix3x3.reshape((-1,) + matrix3x3.shape[-2:])
    m64 = matrix64x64.reshape((-1,) + matrix64x64.shape[-2:])
    assert m3.shape[-2:] == (3, 3)
    assert m64.shape[-2:] == (64, 64)
    B = m3.shape[0]
    assert m64.shape[0] == B and B >= 1

    # ---- 3x3 branch: plain XLA (B*9 floats; not worth a kernel stream) ----
    m3f = m3.astype(jnp.float32)
    g3 = jnp.einsum("bij,bkj->bik", m3f, m3f)
    d3 = g3 - jnp.eye(3, dtype=jnp.float32)
    s3 = jnp.sum(d3 * d3)

    # ---- 64x64 branch: Pallas kernel --------------------------------------
    cfg_block_b, cfg_vmem, force_split = _hw_config()
    if block_b is None:
        block_b = cfg_block_b
    if vmem_limit_bytes is None:
        vmem_limit_bytes = cfg_vmem

    tb = min(block_b, B)
    if force_split and 1 < B <= block_b:
        tb = _cdiv(B, 2)          # guarantee grid >= 2 (v7x megacore sharding)
    grid = _cdiv(B, tb)
    bp = grid * tb
    if bp != B:
        # Each zero-padded matrix contributes exactly 64; removed in epilogue.
        m64 = jnp.pad(m64, ((0, bp - B), (0, 0), (0, 0)))

    itemsize = jnp.dtype(m64.dtype).itemsize
    kernel = functools.partial(_gram_loss_kernel, matmul_dtype=matmul_dtype)
    out = pl.pallas_call(
        kernel,
        out_shape=jax.ShapeDtypeStruct((grid, 8, 128), jnp.float32),
        grid_spec=pltpu.PrefetchScalarGridSpec(
            num_scalar_prefetch=0,
            grid=(grid,),
            in_specs=[
                # NOTE: only add pipeline_mode=pl.Buffered(3) here if a
                # profile shows exposed DMA (v7x) — costs one more 2 MiB buf.
                pl.BlockSpec((tb, 64, 64), lambda b: (b, 0, 0)),
            ],
            out_specs=pl.BlockSpec((1, 8, 128), lambda b: (b, 0, 0)),
        ),
        compiler_params=pltpu.CompilerParams(
            dimension_semantics=("parallel",),
            vmem_limit_bytes=vmem_limit_bytes,
        ),
        cost_estimate=pl.CostEstimate(
            flops=2 * bp * 64 * 64 * 64,
            transcendentals=0,
            bytes_accessed=bp * 64 * 64 * itemsize + grid * 8 * 128 * 4,
        ),
    )(m64)

    s64 = jnp.sum(out[:, 0, 0]) - 64.0 * (bp - B)   # remove zero-pad identity
    return (jnp.sqrt(s3) + jnp.sqrt(s64)) / float(B)


def _reference(matrix3x3, matrix64x64):
    # Direct (torch-equivalent) formulation for validation.
    m3 = matrix3x3.reshape((-1, 3, 3)).astype(jnp.float32)
    m64 = matrix64x64.reshape((-1, 64, 64)).astype(jnp.float32)
    B = m3.shape[0]
    d3 = jnp.eye(3, dtype=jnp.float32) - jnp.einsum("bij,bkj->bik", m3, m3)
    d64 = jnp.eye(64, dtype=jnp.float32) - jnp.einsum("bij,bkj->bik", m64, m64)
    return (jnp.sqrt(jnp.sum(d3 * d3)) + jnp.sqrt(jnp.sum(d64 * d64))) / float(B)


if __name__ == "__main__":
    key = jax.random.PRNGKey(0)
    k1, k2, k3 = jax.random.split(key, 3)
    # Extra leading dims exercise the .flatten(end_dim=-3) path: B = 4.
    matrix3x3 = jax.random.normal(k1, (2, 2, 3, 3), dtype=jnp.float32)
    matrix64x64 = jax.random.normal(k2, (2, 2, 64, 64), dtype=jnp.float32) * 0.1

    ref = _reference(matrix3x3, matrix64x64)

    # Default (bf16 MXU) path.
    loss_bf16 = jax.block_until_ready(pointnet_tr_loss(matrix3x3, matrix64x64))
    assert jnp.allclose(loss_bf16, ref, rtol=2e-2, atol=2e-2), (loss_bf16, ref)

    # f32 MXU path matches the torch formulation tightly.
    loss_f32 = jax.block_until_ready(
        pointnet_tr_loss(matrix3x3, matrix64x64, matmul_dtype=jnp.float32))
    assert jnp.allclose(loss_f32, ref, rtol=1e-4, atol=1e-4), (loss_f32, ref)

    # Near-orthonormal regime (what the regularizer drives toward): the fused
    # (g - I) formulation must not blow up from cancellation.
    q, _ = jnp.linalg.qr(jax.random.normal(k3, (4, 64, 64), dtype=jnp.float32))
    r3 = jnp.broadcast_to(jnp.eye(3, dtype=jnp.float32), (4, 3, 3))
    loss_ortho = jax.block_until_ready(
        pointnet_tr_loss(r3, q, matmul_dtype=jnp.float32))
    ref_ortho = _reference(r3, q)
    assert jnp.abs(loss_ortho - ref_ortho) < 1e-4, (loss_ortho, ref_ortho)

    print("KERNEL_OK")
</pallas_src>

<mosaic_0001>
module attributes {stable_mosaic.version = 11 : i64} {
  func.func @_gram_loss_kernel(%arg0: i32, %arg1: memref<4x64x64xf32, #tpu.memory_space<vmem>>, %arg2: memref<1x8x128xf32, #tpu.memory_space<vmem>>) attributes {dimension_semantics = [#tpu.dimension_semantics<parallel>], iteration_bounds = array<i64: 1>, scalar_prefetch = 0 : i64, scratch_operands = 0 : i64, tpu.core_type = #tpu.core_type<tc>, window_params = [{transform_indices = @transform_0, window_bounds = array<i64: 4, 64, 64>}, {transform_indices = @transform_1, window_bounds = array<i64: 1, 8, 128>}]} {
    %c0 = arith.constant 0 : index
    %c0_0 = arith.constant 0 : index
    %c0_1 = arith.constant 0 : index
    %0 = vector.load %arg1[%c0, %c0_0, %c0_1] : memref<4x64x64xf32, #tpu.memory_space<vmem>>, vector<4x64x64xf32>
    %1 = arith.truncf %0 : vector<4x64x64xf32> to vector<4x64x64xbf16>
    %cst = arith.constant dense<0.000000e+00> : vector<4x64x64xf32>
    %2 = tpu.matmul %1, %1, %cst {dimension_numbers = #tpu.dot_dimension_numbers<[2], [2], [1], [1], [0, 0, 0, 1, 1, 1], [0], [0]>} : vector<4x64x64xbf16>, vector<4x64x64xbf16>, vector<4x64x64xf32> -> vector<4x64x64xf32>
    %3 = tpu.iota {dimensions = array<i32: 1>} : vector<1x64x64xi32>
    %4 = tpu.iota {dimensions = array<i32: 2>} : vector<1x64x64xi32>
    %5 = arith.cmpi eq, %3, %4 : vector<1x64x64xi32>
    %6 = arith.extui %5 : vector<1x64x64xi1> to vector<1x64x64xi32>
    %7 = arith.sitofp %6 : vector<1x64x64xi32> to vector<1x64x64xf32>
    %8 = vector.broadcast %7 : vector<1x64x64xf32> to vector<4x64x64xf32>
    %9 = arith.subf %2, %8 : vector<4x64x64xf32>
    %10 = arith.mulf %9, %9 : vector<4x64x64xf32>
    %11 = vector.shape_cast %10 : vector<4x64x64xf32> to vector<1x4x64x64xf32>
    %cst_2 = arith.constant dense<0.000000e+00> : vector<1xf32>
    %12 = vector.multi_reduction <add>, %11, %cst_2 [1, 2, 3] : vector<1x4x64x64xf32> to vector<1xf32>
    %13 = vector.shape_cast %12 : vector<1xf32> to vector<1x1x1x1xf32>
    %14 = vector.extract %13[0, 0, 0, 0] : f32 from vector<1x1x1x1xf32>
    %15 = vector.broadcast %14 : f32 to vector<1x8x128xf32>
    %c0_3 = arith.constant 0 : index
    %c0_4 = arith.constant 0 : index
    %c0_5 = arith.constant 0 : index
    %16 = vector.load %arg2[%c0_3, %c0_4, %c0_5] : memref<1x8x128xf32, #tpu.memory_space<vmem>>, vector<1x8x128xf32>
    tpu.vector_store %arg2[%c0_3, %c0_4, %c0_5], %15 {strides = array<i32>} : memref<1x8x128xf32, #tpu.memory_space<vmem>>, vector<1x8x128xf32>,
    return
  }
  func.func @transform_0(%arg0: i32) -> (i32, i32, i32) {
    %c0_i32 = arith.constant 0 : i32
    %c0_i32_0 = arith.constant 0 : i32
    %c0_i32_1 = arith.constant 0 : i32
    return %arg0, %c0_i32, %c0_i32_0 : i32, i32, i32
  }
  func.func @transform_1(%arg0: i32) -> (i32, i32, i32) {
    %c0_i32 = arith.constant 0 : i32
    %c0_i32_0 = arith.constant 0 : i32
    %c0_i32_1 = arith.constant 0 : i32
    return %arg0, %c0_i32, %c0_i32_0 : i32, i32, i32
  }
}

</mosaic_0001>

<llo_original>
// kernel: tpu_custom_call.1
$region0: #{tpu_custom_call.1}
  #allocation0 [shape = 'u32[]', space=smem, size = 0x4, offset = 0x4, fixed_abs, tag = 'smem constant byte address 0x4 - core index']
  #allocation1 [shape = 'u32[144,128]{1,0:T(1,128)}', space=vmem, size = 0x12000, scoped, tag = 'internal scratch']
  %s0 = inlined_call_operand.hbm [shape: f32[4,64,64], index: 0, kind: input, shape index: {}]
  %s1 = inlined_call_operand.hbm [shape: f32[1,8,128], index: 1, kind: output, shape index: {}]
  %s2 = sld [smem:[#allocation0]]
  $region18: #{tpu_custom_call.1} parent=0
    _
  %s4 = ssub.s32 1, %s2
  %s5 = scalar_select 0, %s4, %s2
  $region1: #{tpu_custom_call.1} parent=0
    #allocation2 [shape = 'u8[131072]{0}', space=vmem, size = 0x20000, scoped, tag = 'input window, operand 0, single buffered']
    #allocation3 [shape = 's32[1]{0}', space=sflag, size = 0x4, scoped, tag = 'scoped memory for tpu_custom_call.1']
    #allocation4 [shape = 's32[1]{0}', space=sflag, size = 0x4, scoped, tag = 'scoped memory for tpu_custom_call.1']
    #allocation5 [shape = 'u8[4096]{0}', space=vmem, size = 0x1000, scoped, tag = 'output window, operand 0, single buffered']
    %6 = vsyncpa [#allocation3], 0
    %7 = vsyncpa [#allocation4], 0
    // Predicated region
    $region2: #{tpu_custom_call.1} parent=1 // pred_check
      _
    $region3: #{tpu_custom_call.1} parent=1 // pred_check_branch
      %9 = sbr.rel (0) target = $region5
    $region4: #{tpu_custom_call.1} parent=1 // pred_region
      %s11 = ssub.s32 4096, 4096
      %12 = vsyncadd [#allocation3], %s11
      %s13 = sshll.u32 [#allocation2], 4
      %s14 = int_to_ptr.vmem [resolvable:$true] %s13
      %19 = dma.hbm_to_vmem [thread:$0]  %s0, 4096, %s14, [#allocation3], 128, 128, 8
    $region5: #{tpu_custom_call.1} parent=1 // pred_fallthru
      _
    // Predicated region
    $region6: #{tpu_custom_call.1} parent=1 // pred_check
      _
    $region7: #{tpu_custom_call.1} parent=1 // pred_check_branch
      %21 = sbr.rel (0) target = $region9
    $region8: #{tpu_custom_call.1} parent=1 // pred_region
      %22 = dma.done [#allocation3], 4096
    $region9: #{tpu_custom_call.1} parent=1 // pred_fallthru
      _
    %v24 = vld [vmem:[#allocation2] sm:$0xff]
    %v25 = vld [vmem:[#allocation2 + $0x8] sm:$0xff]
    %v26 = vld [vmem:[#allocation2 + $0x10] sm:$0xff]
    %v27 = vld [vmem:[#allocation2 + $0x18] sm:$0xff]
    %v28 = vld [vmem:[#allocation2 + $0x20] sm:$0xff]
    %v29 = vld [vmem:[#allocation2 + $0x28] sm:$0xff]
    %v30 = vld [vmem:[#allocation2 + $0x30] sm:$0xff]
    %v31 = vld [vmem:[#allocation2 + $0x38] sm:$0xff]
    %v32 = vld [vmem:[#allocation2 + $0x40] sm:$0xff]
    %v33 = vld [vmem:[#allocation2 + $0x48] sm:$0xff]
    %v34 = vld [vmem:[#allocation2 + $0x50] sm:$0xff]
    %v35 = vld [vmem:[#allocation2 + $0x58] sm:$0xff]
    %v36 = vld [vmem:[#allocation2 + $0x60] sm:$0xff]
    %v37 = vld [vmem:[#allocation2 + $0x68] sm:$0xff]
    %v38 = vld [vmem:[#allocation2 + $0x70] sm:$0xff]
    %v39 = vld [vmem:[#allocation2 + $0x78] sm:$0xff]
    %v40 = vld [vmem:[#allocation2 + $0x80] sm:$0xff]
    %v41 = vld [vmem:[#allocation2 + $0x88] sm:$0xff]
    %v42 = vld [vmem:[#allocation2 + $0x90] sm:$0xff]
    %v43 = vld [vmem:[#allocation2 + $0x98] sm:$0xff]
    %v44 = vld [vmem:[#allocation2 + $0xa0] sm:$0xff]
    %v45 = vld [vmem:[#allocation2 + $0xa8] sm:$0xff]
    %v46 = vld [vmem:[#allocation2 + $0xb0] sm:$0xff]
    %v47 = vld [vmem:[#allocation2 + $0xb8] sm:$0xff]
    %v48 = vld [vmem:[#allocation2 + $0xc0] sm:$0xff]
    %v49 = vld [vmem:[#allocation2 + $0xc8] sm:$0xff]
    %v50 = vld [vmem:[#allocation2 + $0xd0] sm:$0xff]
    %v51 = vld [vmem:[#allocation2 + $0xd8] sm:$0xff]
    %v52 = vld [vmem:[#allocation2 + $0xe0] sm:$0xff]
    %v53 = vld [vmem:[#allocation2 + $0xe8] sm:$0xff]
    %v54 = vld [vmem:[#allocation2 + $0xf0] sm:$0xff]
    %v55 = vld [vmem:[#allocation2 + $0xf8] sm:$0xff]
    %v56 = vpack.c.bf16 %v25, %v24
    %v57 = vpack.c.bf16 %v27, %v26
    %v58 = vpack.c.bf16 %v29, %v28
    %v59 = vpack.c.bf16 %v31, %v30
    %v60 = vpack.c.bf16 %v33, %v32
    %v61 = vpack.c.bf16 %v35, %v34
    %v62 = vpack.c.bf16 %v37, %v36
    %v63 = vpack.c.bf16 %v39, %v38
    %v64 = vpack.c.bf16 %v41, %v40
    %v65 = vpack.c.bf16 %v43, %v42
    %v66 = vpack.c.bf16 %v45, %v44
    %v67 = vpack.c.bf16 %v47, %v46
    %v68 = vpack.c.bf16 %v49, %v48
    %v69 = vpack.c.bf16 %v51, %v50
    %v70 = vpack.c.bf16 %v53, %v52
    %v71 = vpack.c.bf16 %v55, %v54
    %vm72 = vcmask 523264
    %v74 = vsel %vm72, %v56, 0
    %v77 = vsel %vm72, %v57, 0
    %v80 = vsel %vm72, %v58, 0
    %v83 = vsel %vm72, %v59, 0
    %85 = vmatprep.subr.bf16.mxu0 0
    %86 = vmatpush1.bf16.xpose.msra.mxu0 %v74
    %87 = vmatprep.subr.bf16.mxu0 0
    %88 = vmatpush1.bf16.xpose.msra.mxu0 %v77
    %89 = vmatprep.subr.bf16.mxu0 0
    %90 = vmatpush1.bf16.xpose.msra.mxu0 %v80
    %91 = vmatprep.subr.bf16.mxu0 0
    %92 = vmatpush1.bf16.xpose.msra.mxu0 %v83
    %93 = vmatprep.subr.bf16.mxu0 0
    %94 = vmatpush1.bf16.xpose.msra.mxu0 0
    %95 = vmatprep.subr.bf16.mxu0 0
    %96 = vmatpush1.bf16.xpose.msra.mxu0 0
    %97 = vmatprep.subr.bf16.mxu0 0
    %98 = vmatpush1.bf16.xpose.msra.mxu0 0
    %99 = vmatprep.subr.bf16.mxu0 0
    %100 = vmatpush1.bf16.xpose.msra.mxu0 0
    %101 = vmatprep.subr.bf16.mxu0 0
    %102 = vmatpush1.bf16.xpose.msra.mxu0 0
    %103 = vmatprep.subr.bf16.mxu0 0
    %104 = vmatpush1.bf16.xpose.msra.mxu0 0
    %105 = vmatprep.subr.bf16.mxu0 0
    %106 = vmatpush1.bf16.xpose.msra.mxu0 0
    %107 = vmatprep.subr.bf16.mxu0 0
    %108 = vmatpush1.bf16.xpose.msra.mxu0 0
    %109 = vmatprep.subr.bf16.mxu0 0
    %110 = vmatpush1.bf16.xpose.msra.mxu0 0
    %111 = vmatprep.subr.bf16.mxu0 0
    %112 = vmatpush1.bf16.xpose.msra.mxu0 0
    %113 = vmatprep.subr.bf16.mxu0 0
    %114 = vmatpush1.bf16.xpose.msra.mxu0 0
    %115 = vmatprep.subr.bf16.mxu0 0
    %116 = vmatpush1.bf16.xpose.msra.mxu0 0
    %117 = vmatprep.mubr.bf16.mxu0 0
    %118 = vmatmul.mubr.bf16.gmra.mrb[0].mxu0 %v74
    %v119 = vpop.f32.mrb[0].mxu0
    %v120 = vadd.f32 0.0, %v119
    %v121 = vpop.f32.mrb[0].mxu0
    %v122 = vpop.f32.mrb[0].mxu0
    %v123 = vadd.f32 0.0, %v122
    %v124 = vpop.f32.mrb[0].mxu0
    %125 = vmatprep.mubr.bf16.mxu0 0
    %126 = vmatmul.mubr.bf16.gmra.mrb[0].mxu0 %v77
    %v127 = vpop.f32.mrb[0].mxu0
    %v128 = vadd.f32 0.0, %v127
    %v129 = vpop.f32.mrb[0].mxu0
    %v130 = vpop.f32.mrb[0].mxu0
    %v131 = vadd.f32 0.0, %v130
    %v132 = vpop.f32.mrb[0].mxu0
    %133 = vmatprep.mubr.bf16.mxu0 0
    %134 = vmatmul.mubr.bf16.gmra.mrb[0].mxu0 %v80
    %v135 = vpop.f32.mrb[0].mxu0
    %v136 = vadd.f32 0.0, %v135
    %v137 = vpop.f32.mrb[0].mxu0
    %v138 = vpop.f32.mrb[0].mxu0
    %v139 = vadd.f32 0.0, %v138
    %v140 = vpop.f32.mrb[0].mxu0
    %141 = vmatprep.mubr.bf16.mxu0 0
    %142 = vmatmul.mubr.bf16.gmra.mrb[0].mxu0 %v83
    %v143 = vpop.f32.mrb[0].mxu0
    %v144 = vadd.f32 0.0, %v143
    %v145 = vpop.f32.mrb[0].mxu0
    %v146 = vpop.f32.mrb[0].mxu0
    %v147 = vadd.f32 0.0, %v146
    %v148 = vpop.f32.mrb[0].mxu0
    %149 = vdwg.mxu0
    %v151 = vsel %vm72, %v60, 0
    %v154 = vsel %vm72, %v61, 0
    %v157 = vsel %vm72, %v62, 0
    %v160 = vsel %vm72, %v63, 0
    %162 = vmatprep.subr.bf16.mxu0 0
    %163 = vmatpush1.bf16.xpose.msra.mxu0 %v151
    %164 = vmatprep.subr.bf16.mxu0 0
    %165 = vmatpush1.bf16.xpose.msra.mxu0 %v154
    %166 = vmatprep.subr.bf16.mxu0 0
    %167 = vmatpush1.bf16.xpose.msra.mxu0 %v157
    %168 = vmatprep.subr.bf16.mxu0 0
    %169 = vmatpush1.bf16.xpose.msra.mxu0 %v160
    %170 = vmatprep.subr.bf16.mxu0 0
    %171 = vmatpush1.bf16.xpose.msra.mxu0 0
    %172 = vmatprep.subr.bf16.mxu0 0
    %173 = vmatpush1.bf16.xpose.msra.mxu0 0
    %174 = vmatprep.subr.bf16.mxu0 0
    %175 = vmatpush1.bf16.xpose.msra.mxu0 0
    %176 = vmatprep.subr.bf16.mxu0 0
    %177 = vmatpush1.bf16.xpose.msra.mxu0 0
    %178 = vmatprep.subr.bf16.mxu0 0
    %179 = vmatpush1.bf16.xpose.msra.mxu0 0
    %180 = vmatprep.subr.bf16.mxu0 0
    %181 = vmatpush1.bf16.xpose.msra.mxu0 0
    %182 = vmatprep.subr.bf16.mxu0 0
    %183 = vmatpush1.bf16.xpose.msra.mxu0 0
    %184 = vmatprep.subr.bf16.mxu0 0
    %185 = vmatpush1.bf16.xpose.msra.mxu0 0
    %186 = vmatprep.subr.bf16.mxu0 0
    %187 = vmatpush1.bf16.xpose.msra.mxu0 0
    %188 = vmatprep.subr.bf16.mxu0 0
    %189 = vmatpush1.bf16.xpose.msra.mxu0 0
    %190 = vmatprep.subr.bf16.mxu0 0
    %191 = vmatpush1.bf16.xpose.msra.mxu0 0
    %192 = vmatprep.subr.bf16.mxu0 0
    %193 = vmatpush1.bf16.xpose.msra.mxu0 0
    %194 = vmatprep.mubr.bf16.mxu0 0
    %195 = vmatmul.mubr.bf16.gmra.mrb[0].mxu0 %v151
    %v196 = vpop.f32.mrb[0].mxu0
    %v197 = vadd.f32 0.0, %v196
    %v198 = vpop.f32.mrb[0].mxu0
    %v199 = vpop.f32.mrb[0].mxu0
    %v200 = vadd.f32 0.0, %v199
    %v201 = vpop.f32.mrb[0].mxu0
    %202 = vmatprep.mubr.bf16.mxu0 0
    %203 = vmatmul.mubr.bf16.gmra.mrb[0].mxu0 %v154
    %v204 = vpop.f32.mrb[0].mxu0
    %v205 = vadd.f32 0.0, %v204
    %v206 = vpop.f32.mrb[0].mxu0
    %v207 = vpop.f32.mrb[0].mxu0
    %v208 = vadd.f32 0.0, %v207
    %v209 = vpop.f32.mrb[0].mxu0
    %210 = vmatprep.mubr.bf16.mxu0 0
    %211 = vmatmul.mubr.bf16.gmra.mrb[0].mxu0 %v157
    %v212 = vpop.f32.mrb[0].mxu0
    %v213 = vadd.f32 0.0, %v212
    %v214 = vpop.f32.mrb[0].mxu0
    %v215 = vpop.f32.mrb[0].mxu0
    %v216 = vadd.f32 0.0, %v215
    %v217 = vpop.f32.mrb[0].mxu0
    %218 = vmatprep.mubr.bf16.mxu0 0
    %219 = vmatmul.mubr.bf16.gmra.mrb[0].mxu0 %v160
    %v220 = vpop.f32.mrb[0].mxu0
    %v221 = vadd.f32 0.0, %v220
    %v222 = vpop.f32.mrb[0].mxu0
    %v223 = vpop.f32.mrb[0].mxu0
    %v224 = vadd.f32 0.0, %v223
    %v225 = vpop.f32.mrb[0].mxu0
    %226 = vdwg.mxu0
    %v228 = vsel %vm72, %v64, 0
    %v231 = vsel %vm72, %v65, 0
    %v234 = vsel %vm72, %v66, 0
    %v237 = vsel %vm72, %v67, 0
    %239 = vmatprep.subr.bf16.mxu0 0
    %240 = vmatpush1.bf16.xpose.msra.mxu0 %v228
    %241 = vmatprep.subr.bf16.mxu0 0
    %242 = vmatpush1.bf16.xpose.msra.mxu0 %v231
    %243 = vmatprep.subr.bf16.mxu0 0
    %244 = vmatpush1.bf16.xpose.msra.mxu0 %v234
    %245 = vmatprep.subr.bf16.mxu0 0
    %246 = vmatpush1.bf16.xpose.msra.mxu0 %v237
    %247 = vmatprep.subr.bf16.mxu0 0
    %248 = vmatpush1.bf16.xpose.msra.mxu0 0
    %249 = vmatprep.subr.bf16.mxu0 0
    %250 = vmatpush1.bf16.xpose.msra.mxu0 0
    %251 = vmatprep.subr.bf16.mxu0 0
    %252 = vmatpush1.bf16.xpose.msra.mxu0 0
    %253 = vmatprep.subr.bf16.mxu0 0
    %254 = vmatpush1.bf16.xpose.msra.mxu0 0
    %255 = vmatprep.subr.bf16.mxu0 0
    %256 = vmatpush1.bf16.xpose.msra.mxu0 0
    %257 = vmatprep.subr.bf16.mxu0 0
    %258 = vmatpush1.bf16.xpose.msra.mxu0 0
    %259 = vmatprep.subr.bf16.mxu0 0
    %260 = vmatpush1.bf16.xpose.msra.mxu0 0
    %261 = vmatprep.subr.bf16.mxu0 0
    %262 = vmatpush1.bf16.xpose.msra.mxu0 0
    %263 = vmatprep.subr.bf16.mxu0 0
    %264 = vmatpush1.bf16.xpose.msra.mxu0 0
    %265 = vmatprep.subr.bf16.mxu0 0
    %266 = vmatpush1.bf16.xpose.msra.mxu0 0
    %267 = vmatprep.subr.bf16.mxu0 0
    %268 = vmatpush1.bf16.xpose.msra.mxu0 0
    %269 = vmatprep.subr.bf16.mxu0 0
    %270 = vmatpush1.bf16.xpose.msra.mxu0 0
    %271 = vmatprep.mubr.bf16.mxu0 0
    %272 = vmatmul.mubr.bf16.gmra.mrb[0].mxu0 %v228
    %v273 = vpop.f32.mrb[0].mxu0
    %v274 = vadd.f32 0.0, %v273
    %v275 = vpop.f32.mrb[0].mxu0
    %v276 = vpop.f32.mrb[0].mxu0
    %v277 = vadd.f32 0.0, %v276
    %v278 = vpop.f32.mrb[0].mxu0
    %279 = vmatprep.mubr.bf16.mxu0 0
    %280 = vmatmul.mubr.bf16.gmra.mrb[0].mxu0 %v231
    %v281 = vpop.f32.mrb[0].mxu0
    %v282 = vadd.f32 0.0, %v281
    %v283 = vpop.f32.mrb[0].mxu0
    %v284 = vpop.f32.mrb[0].mxu0
    %v285 = vadd.f32 0.0, %v284
    %v286 = vpop.f32.mrb[0].mxu0
    %287 = vmatprep.mubr.bf16.mxu0 0
    %288 = vmatmul.mubr.bf16.gmra.mrb[0].mxu0 %v234
    %v289 = vpop.f32.mrb[0].mxu0
    %v290 = vadd.f32 0.0, %v289
    %v291 = vpop.f32.mrb[0].mxu0
    %v292 = vpop.f32.mrb[0].mxu0
    %v293 = vadd.f32 0.0, %v292
    %v294 = vpop.f32.mrb[0].mxu0
    %295 = vmatprep.mubr.bf16.mxu0 0
    %296 = vmatmul.mubr.bf16.gmra.mrb[0].mxu0 %v237
    %v297 = vpop.f32.mrb[0].mxu0
    %v298 = vadd.f32 0.0, %v297
    %v299 = vpop.f32.mrb[0].mxu0
    %v300 = vpop.f32.mrb[0].mxu0
    %v301 = vadd.f32 0.0, %v300
    %v302 = vpop.f32.mrb[0].mxu0
    %303 = vdwg.mxu0
    %v305 = vsel %vm72, %v68, 0
    %v308 = vsel %vm72, %v69, 0
    %v311 = vsel %vm72, %v70, 0
    %v314 = vsel %vm72, %v71, 0
    %316 = vmatprep.subr.bf16.mxu0 0
    %317 = vmatpush1.bf16.xpose.msra.mxu0 %v305
    %318 = vmatprep.subr.bf16.mxu0 0
    %319 = vmatpush1.bf16.xpose.msra.mxu0 %v308
    %320 = vmatprep.subr.bf16.mxu0 0
    %321 = vmatpush1.bf16.xpose.msra.mxu0 %v311
    %322 = vmatprep.subr.bf16.mxu0 0
    %323 = vmatpush1.bf16.xpose.msra.mxu0 %v314
    %324 = vmatprep.subr.bf16.mxu0 0
    %325 = vmatpush1.bf16.xpose.msra.mxu0 0
    %326 = vmatprep.subr.bf16.mxu0 0
    %327 = vmatpush1.bf16.xpose.msra.mxu0 0
    %328 = vmatprep.subr.bf16.mxu0 0
    %329 = vmatpush1.bf16.xpose.msra.mxu0 0
    %330 = vmatprep.subr.bf16.mxu0 0
    %331 = vmatpush1.bf16.xpose.msra.mxu0 0
    %332 = vmatprep.subr.bf16.mxu0 0
    %333 = vmatpush1.bf16.xpose.msra.mxu0 0
    %334 = vmatprep.subr.bf16.mxu0 0
    %335 = vmatpush1.bf16.xpose.msra.mxu0 0
    %336 = vmatprep.subr.bf16.mxu0 0
    %337 = vmatpush1.bf16.xpose.msra.mxu0 0
    %338 = vmatprep.subr.bf16.mxu0 0
    %339 = vmatpush1.bf16.xpose.msra.mxu0 0
    %340 = vmatprep.subr.bf16.mxu0 0
    %341 = vmatpush1.bf16.xpose.msra.mxu0 0
    %342 = vmatprep.subr.bf16.mxu0 0
    %343 = vmatpush1.bf16.xpose.msra.mxu0 0
    %344 = vmatprep.subr.bf16.mxu0 0
    %345 = vmatpush1.bf16.xpose.msra.mxu0 0
    %346 = vmatprep.subr.bf16.mxu0 0
    %347 = vmatpush1.bf16.xpose.msra.mxu0 0
    %348 = vmatprep.mubr.bf16.mxu0 0
    %349 = vmatmul.mubr.bf16.gmra.mrb[0].mxu0 %v305
    %v350 = vpop.f32.mrb[0].mxu0
    %v351 = vadd.f32 0.0, %v350
    %v352 = vpop.f32.mrb[0].mxu0
    %v353 = vpop.f32.mrb[0].mxu0
    %v354 = vadd.f32 0.0, %v353
    %v355 = vpop.f32.mrb[0].mxu0
    %356 = vmatprep.mubr.bf16.mxu0 0
    %357 = vmatmul.mubr.bf16.gmra.mrb[0].mxu0 %v308
    %v358 = vpop.f32.mrb[0].mxu0
    %v359 = vadd.f32 0.0, %v358
    %v360 = vpop.f32.mrb[0].mxu0
    %v361 = vpop.f32.mrb[0].mxu0
    %v362 = vadd.f32 0.0, %v361
    %v363 = vpop.f32.mrb[0].mxu0
    %364 = vmatprep.mubr.bf16.mxu0 0
    %365 = vmatmul.mubr.bf16.gmra.mrb[0].mxu0 %v311
    %v366 = vpop.f32.mrb[0].mxu0
    %v367 = vadd.f32 0.0, %v366
    %v368 = vpop.f32.mrb[0].mxu0
    %v369 = vpop.f32.mrb[0].mxu0
    %v370 = vadd.f32 0.0, %v369
    %v371 = vpop.f32.mrb[0].mxu0
    %372 = vmatprep.mubr.bf16.mxu0 0
    %373 = vmatmul.mubr.bf16.gmra.mrb[0].mxu0 %v314
    %v374 = vpop.f32.mrb[0].mxu0
    %v375 = vadd.f32 0.0, %v374
    %v376 = vpop.f32.mrb[0].mxu0
    %v377 = vpop.f32.mrb[0].mxu0
    %v378 = vadd.f32 0.0, %v377
    %v379 = vpop.f32.mrb[0].mxu0
    %380 = vdwg.mxu0
    %v381 = vlaneseq
    %v382 = vshrl.u32 %v381, 7
    %v383 = vadd.s32 %v382, 8
    %v384 = vadd.s32 %v382, 16
    %v385 = vadd.s32 %v382, 24
    %v386 = vadd.s32 %v382, 32
    %v387 = vadd.s32 %v382, 40
    %v388 = vadd.s32 %v382, 48
    %v389 = vadd.s32 %v382, 56
    %v390 = vlaneseq
    %v391 = vand.u32 %v390, 127
    %vm392 = vcmp.eq.s32.totalorder %v382, %v391
    %vm393 = vcmp.eq.s32.totalorder %v383, %v391
    %vm394 = vcmp.eq.s32.totalorder %v384, %v391
    %vm395 = vcmp.eq.s32.totalorder %v385, %v391
    %vm396 = vcmp.eq.s32.totalorder %v386, %v391
    %vm397 = vcmp.eq.s32.totalorder %v387, %v391
    %vm398 = vcmp.eq.s32.totalorder %v388, %v391
    %vm399 = vcmp.eq.s32.totalorder %v389, %v391
    %v400 = vsel %vm392, 1, 0
    %v401 = vsel %vm393, 1, 0
    %v402 = vsel %vm394, 1, 0
    %v403 = vsel %vm395, 1, 0
    %v404 = vsel %vm396, 1, 0
    %v405 = vsel %vm397, 1, 0
    %v406 = vsel %vm398, 1, 0
    %v407 = vsel %vm399, 1, 0
    %v408 = vcvt.s32.f32 %v400
    %v409 = vcvt.s32.f32 %v401
    %v410 = vcvt.s32.f32 %v402
    %v411 = vcvt.s32.f32 %v403
    %v412 = vcvt.s32.f32 %v404
    %v413 = vcvt.s32.f32 %v405
    %v414 = vcvt.s32.f32 %v406
    %v415 = vcvt.s32.f32 %v407
    %v416 = vsub.f32 %v120, %v408
    %v417 = vsub.f32 %v123, %v409
    %v418 = vsub.f32 %v128, %v410
    %v419 = vsub.f32 %v131, %v411
    %v420 = vsub.f32 %v136, %v412
    %v421 = vsub.f32 %v139, %v413
    %v422 = vsub.f32 %v144, %v414
    %v423 = vsub.f32 %v147, %v415
    %v424 = vsub.f32 %v197, %v408
    %v425 = vsub.f32 %v200, %v409
    %v426 = vsub.f32 %v205, %v410
    %v427 = vsub.f32 %v208, %v411
    %v428 = vsub.f32 %v213, %v412
    %v429 = vsub.f32 %v216, %v413
    %v430 = vsub.f32 %v221, %v414
    %v431 = vsub.f32 %v224, %v415
    %v432 = vsub.f32 %v274, %v408
    %v433 = vsub.f32 %v277, %v409
    %v434 = vsub.f32 %v282, %v410
    %v435 = vsub.f32 %v285, %v411
    %v436 = vsub.f32 %v290, %v412
    %v437 = vsub.f32 %v293, %v413
    %v438 = vsub.f32 %v298, %v414
    %v439 = vsub.f32 %v301, %v415
    %v440 = vsub.f32 %v351, %v408
    %v441 = vsub.f32 %v354, %v409
    %v442 = vsub.f32 %v359, %v410
    %v443 = vsub.f32 %v362, %v411
    %v444 = vsub.f32 %v367, %v412
    %v445 = vsub.f32 %v370, %v413
    %v446 = vsub.f32 %v375, %v414
    %v447 = vsub.f32 %v378, %v415
    %v448 = vmul.f32 %v416, %v416
    %v449 = vmul.f32 %v417, %v417
    %v450 = vmul.f32 %v418, %v418
    %v451 = vmul.f32 %v419, %v419
    %v452 = vmul.f32 %v420, %v420
    %v453 = vmul.f32 %v421, %v421
    %v454 = vmul.f32 %v422, %v422
    %v455 = vmul.f32 %v423, %v423
    %v456 = vmul.f32 %v424, %v424
    %v457 = vmul.f32 %v425, %v425
    %v458 = vmul.f32 %v426, %v426
    %v459 = vmul.f32 %v427, %v427
    %v460 = vmul.f32 %v428, %v428
    %v461 = vmul.f32 %v429, %v429
    %v462 = vmul.f32 %v430, %v430
    %v463 = vmul.f32 %v431, %v431
    %v464 = vmul.f32 %v432, %v432
    %v465 = vmul.f32 %v433, %v433
    %v466 = vmul.f32 %v434, %v434
    %v467 = vmul.f32 %v435, %v435
    %v468 = vmul.f32 %v436, %v436
    %v469 = vmul.f32 %v437, %v437
    %v470 = vmul.f32 %v438, %v438
    %v471 = vmul.f32 %v439, %v439
    %v472 = vmul.f32 %v440, %v440
    %v473 = vmul.f32 %v441, %v441
    %v474 = vmul.f32 %v442, %v442
    %v475 = vmul.f32 %v443, %v443
    %v476 = vmul.f32 %v444, %v444
    %v477 = vmul.f32 %v445, %v445
    %v478 = vmul.f32 %v446, %v446
    %v479 = vmul.f32 %v447, %v447
    %v480 = vsel %vm72, %v448, 0.0
    %v481 = vsel %vm72, %v449, 0.0
    %v482 = vadd.f32 %v480, %v481
    %v483 = vsel %vm72, %v450, 0.0
    %v484 = vadd.f32 %v482, %v483
    %v485 = vsel %vm72, %v451, 0.0
    %v486 = vadd.f32 %v484, %v485
    %v487 = vsel %vm72, %v452, 0.0
    %v488 = vadd.f32 %v486, %v487
    %v489 = vsel %vm72, %v453, 0.0
    %v490 = vadd.f32 %v488, %v489
    %v491 = vsel %vm72, %v454, 0.0
    %v492 = vadd.f32 %v490, %v491
    %v493 = vsel %vm72, %v455, 0.0
    %v494 = vadd.f32 %v492, %v493
    %v495 = vsel %vm72, %v456, 0.0
    %v496 = vadd.f32 %v494, %v495
    %v497 = vsel %vm72, %v457, 0.0
    %v498 = vadd.f32 %v496, %v497
    %v499 = vsel %vm72, %v458, 0.0
    %v500 = vadd.f32 %v498, %v499
    %v501 = vsel %vm72, %v459, 0.0
    %v502 = vadd.f32 %v500, %v501
    %v503 = vsel %vm72, %v460, 0.0
    %v504 = vadd.f32 %v502, %v503
    %v505 = vsel %vm72, %v461, 0.0
    %v506 = vadd.f32 %v504, %v505
    %v507 = vsel %vm72, %v462, 0.0
    %v508 = vadd.f32 %v506, %v507
    %v509 = vsel %vm72, %v463, 0.0
    %v510 = vadd.f32 %v508, %v509
    %v511 = vsel %vm72, %v464, 0.0
    %v512 = vadd.f32 %v510, %v511
    %v513 = vsel %vm72, %v465, 0.0
    %v514 = vadd.f32 %v512, %v513
    %v515 = vsel %vm72, %v466, 0.0
    %v516 = vadd.f32 %v514, %v515
    %v517 = vsel %vm72, %v467, 0.0
    %v518 = vadd.f32 %v516, %v517
    %v519 = vsel %vm72, %v468, 0.0
    %v520 = vadd.f32 %v518, %v519
    %v521 = vsel %vm72, %v469, 0.0
    %v522 = vadd.f32 %v520, %v521
    %v523 = vsel %vm72, %v470, 0.0
    %v524 = vadd.f32 %v522, %v523
    %v525 = vsel %vm72, %v471, 0.0
    %v526 = vadd.f32 %v524, %v525
    %v527 = vsel %vm72, %v472, 0.0
    %v528 = vadd.f32 %v526, %v527
    %v529 = vsel %vm72, %v473, 0.0
    %v530 = vadd.f32 %v528, %v529
    %v531 = vsel %vm72, %v474, 0.0
    %v532 = vadd.f32 %v530, %v531
    %v533 = vsel %vm72, %v475, 0.0
    %v534 = vadd.f32 %v532, %v533
    %v535 = vsel %vm72, %v476, 0.0
    %v536 = vadd.f32 %v534, %v535
    %v537 = vsel %vm72, %v477, 0.0
    %v538 = vadd.f32 %v536, %v537
    %v539 = vsel %vm72, %v478, 0.0
    %v540 = vadd.f32 %v538, %v539
    %v541 = vsel %vm72, %v479, 0.0
    %v542 = vadd.f32 %v540, %v541
    %543 = vadd.xlane.f32.xlu0 %v542
    %v544 = vpop.xlane.xlu0 %543
    %v545 = vrot.slane %v544, 4
    %v546 = vadd.f32 %v544, %v545
    %v547 = vrot.slane %v546, 2
    %v548 = vadd.f32 %v546, %v547
    %v549 = vrot.slane %v548, 1
    %v550 = vadd.f32 %v548, %v549
    %s551 = vtos %v550
    %v552 = vstv %s551
    %553 = vst [vmem:[#allocation5] sm:$0xff] %v552
    // Predicated region
    $region10: #{tpu_custom_call.1} parent=1 // pred_check
      _
    $region11: #{tpu_custom_call.1} parent=1 // pred_check_branch
      %555 = sbr.rel (0) target = $region13
    $region12: #{tpu_custom_call.1} parent=1 // pred_region
      %s557 = ssub.s32 128, 128
      %558 = vsyncadd [#allocation4], %s557
      %s560 = sshll.u32 [#allocation5], 4
      %s561 = int_to_ptr.vmem [resolvable:$true] %s560
      %563 = dma.vmem_to_hbm [thread:$0]  %s561, 128, %s1, [#allocation4]
    $region13: #{tpu_custom_call.1} parent=1 // pred_fallthru
      _
    // Predicated region
    $region14: #{tpu_custom_call.1} parent=1 // pred_check
      _
    $region15: #{tpu_custom_call.1} parent=1 // pred_check_branch
      %565 = sbr.rel (0) target = $region17
    $region16: #{tpu_custom_call.1} parent=1 // pred_region
      %566 = dma.done [#allocation4], 128
    $region17: #{tpu_custom_call.1} parent=1 // pred_fallthru
      _
    %567 = vsyncpa [#allocation3], 1
    %568 = vsyncpa [#allocation4], 1

</llo_original>
